<compile_context>
chip_gen: v7x
topology: tpu7x:2x2x1
jax: 0.10.0
libtpu: 0.0.40
codegen_flags: <defaults>
</compile_context>

<pallas_src>
import functools

import jax
import jax.numpy as jnp
from jax.experimental import pallas as pl
from jax.experimental.pallas import tpu as pltpu


def _round_up(x: int, m: int) -> int:
    return ((x + m - 1) // m) * m


def _ffn_kernel(x_ref, w12_ref, w3_ref, o_ref, acc_ref):
    """Grid = (token tiles, hidden tiles).  One step: one (tm, th) H-chunk."""
    j = pl.program_id(1)

    @pl.when(j == 0)
    def _():
        acc_ref[...] = jnp.zeros_like(acc_ref)

    th = w3_ref.shape[0]                                    # static block size

    x = x_ref[...]                                          # (tm, E)
    w12 = w12_ref[...]                                      # (E, 2*th) = [W1 | W2]

    # Single fused gate/up GEMM, f32 accumulation on the MXU.
    h = jnp.dot(x, w12, preferred_element_type=jnp.float32)    # (tm, 2*th)
    gate = h[:, :th]                                            # lane-aligned slice
    up = h[:, th:]

    # SiLU (x * sigmoid(x)) in f32; sigmoid goes to the EUP slot.
    gated = (gate * jax.nn.sigmoid(gate)) * up                  # (tm, th) f32

    # Partial down-projection, accumulated across H tiles in f32.
    acc_ref[...] += jnp.dot(gated.astype(w3_ref.dtype), w3_ref[...],
                            preferred_element_type=jnp.float32)

    @pl.when(j == pl.num_programs(1) - 1)
    def _():
        o_ref[...] = acc_ref[...].astype(o_ref.dtype)


@functools.partial(jax.jit, static_argnames=("tm", "th"))
def feed_forward(x, w1, w2, w3, *, tm=256, th=512):
    """SwiGLU FFN.

    x : (B, S, E); w1, w2 : (E, H); w3 : (H, E).  Returns (B, S, E) in x.dtype.
    tm: token-tile rows (>=8, multiple of 8).  th: hidden-tile cols (mult of 128).
    """
    B, S, E = x.shape
    E_w, H = w1.shape
    assert E_w == E and w2.shape == (E, H) and w3.shape == (H, E)
    assert E % 128 == 0, "emb_dim must be a multiple of 128 for TPU lanes"
    assert H % 128 == 0, "hidden_dim must be a multiple of 128 for TPU lanes"

    M = B * S

    # Clamp the token tile to the (padded) problem size for toy shapes.
    tm_eff = min(tm, _round_up(M, 8))
    tm_eff = max(8, _round_up(tm_eff, 8))

    # Pick the largest H tile <= th that is a multiple of 128 and divides H.
    th_eff = min(_round_up(th, 128), H)
    while H % th_eff != 0:
        th_eff -= 128
    n_h = H // th_eff

    # Pad the token dim so every grid block is full (no garbage partial blocks);
    # padded rows are sliced off afterwards.
    M_pad = _round_up(M, tm_eff)
    x2d = x.reshape(M, E)
    if M_pad != M:
        x2d = jnp.pad(x2d, ((0, M_pad - M), (0, 0)))

    # Fuse W1/W2 into one (E, 2H) weight, interleaved per H-tile so each
    # (E, 2*th) block is [W1 tile j | W2 tile j].
    # TODO(synk): in a real model, do this re-layout once at weight-load time.
    w12 = jnp.concatenate(
        [w1.reshape(E, n_h, th_eff), w2.reshape(E, n_h, th_eff)], axis=-1
    ).reshape(E, 2 * H)

    grid = (M_pad // tm_eff, n_h)

    bytes_accessed = (
        x2d.size * x2d.dtype.itemsize
        + w12.size * w12.dtype.itemsize
        + w3.size * w3.dtype.itemsize
        + M_pad * E * x.dtype.itemsize
    )
    cost = pl.CostEstimate(
        flops=6 * M_pad * E * H,          # 2*M*E*2H (gate/up) + 2*M*H*E (down)
        transcendentals=M_pad * H,        # sigmoid
        bytes_accessed=bytes_accessed,
    )

    out2d = pl.pallas_call(
        _ffn_kernel,
        out_shape=jax.ShapeDtypeStruct((M_pad, E), x.dtype),
        grid_spec=pltpu.PrefetchScalarGridSpec(
            num_scalar_prefetch=0,
            grid=grid,
            in_specs=[
                pl.BlockSpec((tm_eff, E), lambda i, j: (i, 0)),       # x tile
                pl.BlockSpec((E, 2 * th_eff), lambda i, j: (0, j)),   # [W1|W2] tile
                pl.BlockSpec((th_eff, E), lambda i, j: (j, 0)),       # W3 tile
            ],
            out_specs=pl.BlockSpec((tm_eff, E), lambda i, j: (i, 0)),
            scratch_shapes=[pltpu.VMEM((tm_eff, E), jnp.float32)],    # f32 acc
        ),
        compiler_params=pltpu.CompilerParams(
            # token tiles independent (megacore-shardable); H is the reduction.
            dimension_semantics=("parallel", "arbitrary"),
            # explicit scoped-VMEM budget, safe on v7x's 64 MiB physical VMEM
            vmem_limit_bytes=56 * 1024 * 1024,
        ),
        cost_estimate=cost,
    )(x2d, w12, w3)

    return out2d[:M].reshape(B, S, E)


def feed_forward_ref(x, w1, w2, w3):
    """Pure-JAX reference matching the PyTorch forward (f32 accumulation)."""
    h1 = jnp.einsum("bse,eh->bsh", x, w1, preferred_element_type=jnp.float32)
    h2 = jnp.einsum("bse,eh->bsh", x, w2, preferred_element_type=jnp.float32)
    gated = jax.nn.silu(h1) * h2
    out = jnp.einsum("bsh,he->bse", gated.astype(w3.dtype), w3,
                     preferred_element_type=jnp.float32)
    return out.astype(x.dtype)


if __name__ == "__main__":
    # Small shapes consistent with the module: batch=2, seq=8, emb_dim=128,
    # hidden_dim=256 (multiples of (8, 128) for clean TPU tiling).
    B, S, E, H = 2, 8, 128, 256

    key = jax.random.PRNGKey(0)
    kx, k1, k2, k3 = jax.random.split(key, 4)

    x = jax.random.normal(kx, (B, S, E), dtype=jnp.float32)
    # Pre-transposed weights: (in, out) layout.
    w1 = jax.random.normal(k1, (E, H), dtype=jnp.float32) * (1.0 / E) ** 0.5
    w2 = jax.random.normal(k2, (E, H), dtype=jnp.float32) * (1.0 / E) ** 0.5
    w3 = jax.random.normal(k3, (H, E), dtype=jnp.float32) * (1.0 / H) ** 0.5

    # --- f32 path (matches PyTorch defaults).  th=128 forces 2 H-tiles so the
    # accumulator init/accumulate/finalize path is exercised at toy sizes.
    out = feed_forward(x, w1, w2, w3, tm=256, th=128)
    out = jax.block_until_ready(out)
    ref = feed_forward_ref(x, w1, w2, w3)
    assert out.shape == (B, S, E), out.shape
    assert jnp.allclose(out, ref, atol=1e-4, rtol=1e-4), float(
        jnp.max(jnp.abs(out - ref))
    )

    # --- single-H-tile path (default th clamps to H) — exercises n_h == 1.
    out1 = jax.block_until_ready(feed_forward(x, w1, w2, w3))
    assert jnp.allclose(out1, ref, atol=1e-4, rtol=1e-4)

    # --- bf16 weights/activations with f32 accumulation (production config);
    # compared against a bf16 reference with bf16-appropriate tolerances.
    xb, w1b, w2b, w3b = (a.astype(jnp.bfloat16) for a in (x, w1, w2, w3))
    out_bf16 = jax.block_until_ready(feed_forward(xb, w1b, w2b, w3b, tm=256, th=128))
    ref_bf16 = feed_forward_ref(xb, w1b, w2b, w3b)
    assert out_bf16.shape == (B, S, E)
    assert jnp.allclose(out_bf16.astype(jnp.float32), ref_bf16.astype(jnp.float32),
                        atol=5e-2, rtol=5e-2), float(
        jnp.max(jnp.abs(out_bf16.astype(jnp.float32) - ref_bf16.astype(jnp.float32)))
    )

    print("KERNEL_OK")
</pallas_src>

<mosaic_0001>
module attributes {stable_mosaic.version = 11 : i64} {
  func.func @_ffn_kernel(%arg0: i32, %arg1: i32, %arg2: memref<16x128xf32, #tpu.memory_space<vmem>>, %arg3: memref<128x256xf32, #tpu.memory_space<vmem>>, %arg4: memref<128x128xf32, #tpu.memory_space<vmem>>, %arg5: memref<16x128xf32, #tpu.memory_space<vmem>>, %arg6: memref<16x128xf32, #tpu.memory_space<vmem>>) attributes {dimension_semantics = [#tpu.dimension_semantics<parallel>, #tpu.dimension_semantics<arbitrary>], iteration_bounds = array<i64: 1, 2>, scalar_prefetch = 0 : i64, scratch_operands = 1 : i64, tpu.core_type = #tpu.core_type<tc>, window_params = [{transform_indices = @transform_0, window_bounds = array<i64: 16, 128>}, {transform_indices = @transform_1, window_bounds = array<i64: 128, 256>}, {transform_indices = @transform_2, window_bounds = array<i64: 128, 128>}, {transform_indices = @transform_3, window_bounds = array<i64: 16, 128>}]} {
    %c0_i32 = arith.constant 0 : i32
    %0 = arith.cmpi eq, %arg1, %c0_i32 : i32
    %1 = arith.extui %0 : i1 to i32
    %c0_i32_0 = arith.constant 0 : i32
    %2 = arith.cmpi ne, %1, %c0_i32_0 : i32
    scf.if %2 {
      %cst_13 = arith.constant 0.000000e+00 : f32
      %23 = vector.broadcast %cst_13 : f32 to vector<16x128xf32>
      %c0_14 = arith.constant 0 : index
      %c0_15 = arith.constant 0 : index
      %24 = vector.load %arg6[%c0_14, %c0_15] : memref<16x128xf32, #tpu.memory_space<vmem>>, vector<16x128xf32>
      tpu.vector_store %arg6[%c0_14, %c0_15], %23 {strides = array<i32>} : memref<16x128xf32, #tpu.memory_space<vmem>>, vector<16x128xf32>,
    } else {
    }
    %c0 = arith.constant 0 : index
    %c0_1 = arith.constant 0 : index
    %3 = vector.load %arg2[%c0, %c0_1] : memref<16x128xf32, #tpu.memory_space<vmem>>, vector<16x128xf32>
    %c0_2 = arith.constant 0 : index
    %c0_3 = arith.constant 0 : index
    %4 = vector.load %arg3[%c0_2, %c0_3] : memref<128x256xf32, #tpu.memory_space<vmem>>, vector<128x256xf32>
    %cst = arith.constant dense<0.000000e+00> : vector<16x256xf32>
    %5 = tpu.matmul %3, %4, %cst {dimension_numbers = #tpu.dot_dimension_numbers<[1], [0], [0], [1], [0, 0, 1, 1], [], []>} : vector<16x128xf32>, vector<128x256xf32>, vector<16x256xf32> -> vector<16x256xf32>
    %6 = vector.extract_strided_slice %5 {offsets = [0, 0], sizes = [16, 128], strides = [1, 1]} : vector<16x256xf32> to vector<16x128xf32>
    %7 = vector.extract_strided_slice %5 {offsets = [0, 128], sizes = [16, 128], strides = [1, 1]} : vector<16x256xf32> to vector<16x128xf32>
    %8 = arith.negf %6 : vector<16x128xf32>
    %9 = math.exp %8 : vector<16x128xf32>
    %cst_4 = arith.constant 1.000000e+00 : f32
    %10 = vector.broadcast %cst_4 : f32 to vector<16x128xf32>
    %11 = arith.addf %10, %9 : vector<16x128xf32>
    %12 = arith.divf %10, %11 : vector<16x128xf32>
    %13 = arith.mulf %6, %12 : vector<16x128xf32>
    %14 = arith.mulf %13, %7 : vector<16x128xf32>
    %c0_5 = arith.constant 0 : index
    %c0_6 = arith.constant 0 : index
    %15 = vector.load %arg6[%c0_5, %c0_6] : memref<16x128xf32, #tpu.memory_space<vmem>>, vector<16x128xf32>
    %c0_7 = arith.constant 0 : index
    %c0_8 = arith.constant 0 : index
    %16 = vector.load %arg4[%c0_7, %c0_8] : memref<128x128xf32, #tpu.memory_space<vmem>>, vector<128x128xf32>
    %cst_9 = arith.constant dense<0.000000e+00> : vector<16x128xf32>
    %17 = tpu.matmul %14, %16, %cst_9 {dimension_numbers = #tpu.dot_dimension_numbers<[1], [0], [0], [1], [0, 0, 1, 1], [], []>} : vector<16x128xf32>, vector<128x128xf32>, vector<16x128xf32> -> vector<16x128xf32>
    %18 = arith.addf %15, %17 : vector<16x128xf32>
    %c0_10 = arith.constant 0 : index
    %c0_11 = arith.constant 0 : index
    %19 = vector.load %arg6[%c0_10, %c0_11] : memref<16x128xf32, #tpu.memory_space<vmem>>, vector<16x128xf32>
    tpu.vector_store %arg6[%c0_10, %c0_11], %18 {strides = array<i32>} : memref<16x128xf32, #tpu.memory_space<vmem>>, vector<16x128xf32>,
    %c1_i32 = arith.constant 1 : i32
    %20 = arith.cmpi eq, %arg1, %c1_i32 : i32
    %21 = arith.extui %20 : i1 to i32
    %c0_i32_12 = arith.constant 0 : i32
    %22 = arith.cmpi ne, %21, %c0_i32_12 : i32
    scf.if %22 {
      %c0_13 = arith.constant 0 : index
      %c0_14 = arith.constant 0 : index
      %23 = vector.load %arg6[%c0_13, %c0_14] : memref<16x128xf32, #tpu.memory_space<vmem>>, vector<16x128xf32>
      %c0_15 = arith.constant 0 : index
      %c0_16 = arith.constant 0 : index
      %24 = vector.load %arg5[%c0_15, %c0_16] : memref<16x128xf32, #tpu.memory_space<vmem>>, vector<16x128xf32>
      tpu.vector_store %arg5[%c0_15, %c0_16], %23 {strides = array<i32>} : memref<16x128xf32, #tpu.memory_space<vmem>>, vector<16x128xf32>,
    } else {
    }
    return
  }
  func.func @transform_0(%arg0: i32, %arg1: i32) -> (i32, i32) {
    %c0_i32 = arith.constant 0 : i32
    %c0_i32_0 = arith.constant 0 : i32
    return %arg0, %c0_i32 : i32, i32
  }
  func.func @transform_1(%arg0: i32, %arg1: i32) -> (i32, i32) {
    %c0_i32 = arith.constant 0 : i32
    %c0_i32_0 = arith.constant 0 : i32
    return %c0_i32, %arg1 : i32, i32
  }
  func.func @transform_2(%arg0: i32, %arg1: i32) -> (i32, i32) {
    %c0_i32 = arith.constant 0 : i32
    %c0_i32_0 = arith.constant 0 : i32
    return %arg1, %c0_i32 : i32, i32
  }
  func.func @transform_3(%arg0: i32, %arg1: i32) -> (i32, i32) {
    %c0_i32 = arith.constant 0 : i32
    %c0_i32_0 = arith.constant 0 : i32
    return %arg0, %c0_i32 : i32, i32
  }
}

</mosaic_0001>

<llo_original>
// kernel: feed_forward.1
$region0: #{feed_forward.1}
  #allocation0 [shape = 'u32[]', space=smem, size = 0x4, offset = 0x4, fixed_abs, tag = 'smem constant byte address 0x4 - core index']
  #allocation1 [shape = 'u32[144,128]{1,0:T(1,128)}', space=vmem, size = 0x12000, scoped, tag = 'internal scratch']
  #allocation2 [shape = 'f32[16,128]{1,0:T(8,128)}', space=vmem, size = 0x2000, scoped, tag = 'scratch operand']
  %s0 = inlined_call_operand.vmem [shape: f32[16,128], index: 0, kind: input, shape index: {}]
  %s1 = inlined_call_operand.vmem [shape: f32[128,512], index: 1, kind: input, shape index: {}]
  %s2 = inlined_call_operand.vmem [shape: f32[256,128], index: 2, kind: input, shape index: {}]
  %s3 = inlined_call_operand.hbm [shape: f32[16,128], index: 3, kind: output, shape index: {}]
  %s4 = sld [smem:[#allocation0]]
  $region76: #{feed_forward.1} parent=0
    _
  %s6 = ssub.s32 1, %s4
  %s7 = scalar_select 0, %s6, %s4
  $region1: #{feed_forward.1} parent=0
    #allocation3 [shape = 'u8[262144]{0}', space=vmem, size = 0x40000, scoped, tag = 'input window, operand 1']
    #allocation4 [shape = 'u8[8192]{0}', space=vmem, size = 0x2000, scoped, tag = 'output window, operand 0, single buffered']
    #allocation5 [shape = 's32[2]{0}', space=sflag, size = 0x8, scoped, tag = 'scoped memory for feed_forward.1']
    %8 = vsyncpa [#allocation5], 0
    loop: start=0, step=1, limit=4
    $region2: #{feed_forward.1} parent=1 // loop_pre_header
      _
    $region3: #{feed_forward.1} parent=1 // loop_header
      %s10 = sphi 0, %s14
      %p11 = scmp.ge.s32.totalorder %s10, 4
      %s17 = sphi 0, %s29
      %s18 = sphi 0, %s25
      %s19 = sphi 0, %s17
      %s20 = sphi 0, %s18
      %s21 = sphi 0, %s19
      %s22 = sphi 0, %s20
      %s32 = sphi 0, %s34
      %s35 = sphi 0, %s32
      %s36 = sphi 0, %s35
      %s52 = sphi 0, %s36
      %s58 = sphi 0, %s60
      %s61 = sphi 0, %s58
      %s62 = sphi 0, %s61
      %s78 = sphi 0, %s62
      %s84 = sphi 0, %s86
      %s87 = sphi 0, %s84
      %s88 = sphi 0, %s87
      %s104 = sphi 0, %s88
      %s110 = sphi 0, %s112
      %s113 = sphi 0, %s110
      %s114 = sphi 0, %s113
      %s130 = sphi 0, %s114
    $region4: #{feed_forward.1} parent=1 // loop_header_branch
      %13 = sbr.rel (%p11) target = $region8
    $region5: #{feed_forward.1} parent=1 // loop_body
      %s15 = ssub.s32 %s10, 1
      %s16 = ssub.s32 %s10, 2
      %s23 = sadd.s32 1, %s18
      %p24 = scmp.ge.s32.totalorder %s23, 2
      %s25 = scalar_select %p24, 0, %s23
      %s26 = sadd.s32 1, %s17
      %s27 = scalar_select %p24, %s26, %s17
      %p28 = scmp.ge.s32.totalorder %s27, 1
      %s29 = scalar_select %p28, 0, %s27
      %s30 = ssub.s32 %s17, %s29
      %p31 = scmp.eq.s32.totalorder %s30, 0
      %s33 = sadd.s32 %s32, 1
      %s34 = scalar_select %p31, %s32, %s33
      %p37 = pneg %p31
      %p38 = scmp.eq.s32.totalorder %s10, 1
      %p39 = por %p37, %p38
      %p40 = scmp.ne.s32.totalorder %s32, %s35
      %p41 = scmp.eq.s32.totalorder %s10, 0
      %p42 = por %p40, %p41
      %p43 = scmp.ne.s32.totalorder %s32, %s35
      %p44 = scmp.eq.s32.totalorder %s15, 1
      %p45 = por %p43, %p44
      %p46 = scmp.ne.s32.totalorder %s35, %s36
      %p47 = scmp.eq.s32.totalorder %s15, 0
      %p48 = por %p46, %p47
      %p49 = scmp.ne.s32.totalorder %s35, %s36
      %p50 = scmp.eq.s32.totalorder %s16, 1
      %p51 = por %p49, %p50
      %p53 = scmp.ne.s32.totalorder %s36, %s52
      %p54 = scmp.eq.s32.totalorder %s16, 0
      %p55 = por %p53, %p54
      %s56 = ssub.s32 %s18, %s25
      %p57 = scmp.eq.s32.totalorder %s56, 0
      %s59 = sadd.s32 %s58, 1
      %s60 = scalar_select %p57, %s58, %s59
      %p63 = pneg %p57
      %p64 = scmp.eq.s32.totalorder %s10, 1
      %p65 = por %p63, %p64
      %p66 = scmp.ne.s32.totalorder %s58, %s61
      %p67 = scmp.eq.s32.totalorder %s10, 0
      %p68 = por %p66, %p67
      %p69 = scmp.ne.s32.totalorder %s58, %s61
      %p70 = scmp.eq.s32.totalorder %s15, 1
      %p71 = por %p69, %p70
      %p72 = scmp.ne.s32.totalorder %s61, %s62
      %p73 = scmp.eq.s32.totalorder %s15, 0
      %p74 = por %p72, %p73
      %p75 = scmp.ne.s32.totalorder %s61, %s62
      %p76 = scmp.eq.s32.totalorder %s16, 1
      %p77 = por %p75, %p76
      %p79 = scmp.ne.s32.totalorder %s62, %s78
      %p80 = scmp.eq.s32.totalorder %s16, 0
      %p81 = por %p79, %p80
      %s82 = ssub.s32 %s18, %s25
      %p83 = scmp.eq.s32.totalorder %s82, 0
      %s85 = sadd.s32 %s84, 1
      %s86 = scalar_select %p83, %s84, %s85
      %p89 = pneg %p83
      %p90 = scmp.eq.s32.totalorder %s10, 1
      %p91 = por %p89, %p90
      %p92 = scmp.ne.s32.totalorder %s84, %s87
      %p93 = scmp.eq.s32.totalorder %s10, 0
      %p94 = por %p92, %p93
      %p95 = scmp.ne.s32.totalorder %s84, %s87
      %p96 = scmp.eq.s32.totalorder %s15, 1
      %p97 = por %p95, %p96
      %p98 = scmp.ne.s32.totalorder %s87, %s88
      %p99 = scmp.eq.s32.totalorder %s15, 0
      %p100 = por %p98, %p99
      %p101 = scmp.ne.s32.totalorder %s87, %s88
      %p102 = scmp.eq.s32.totalorder %s16, 1
      %p103 = por %p101, %p102
      %p105 = scmp.ne.s32.totalorder %s88, %s104
      %p106 = scmp.eq.s32.totalorder %s16, 0
      %p107 = por %p105, %p106
      %s108 = ssub.s32 %s17, %s29
      %p109 = scmp.eq.s32.totalorder %s108, 0
      %s111 = sadd.s32 %s110, 1
      %s112 = scalar_select %p109, %s110, %s111
      %p115 = pneg %p109
      %p116 = scmp.eq.s32.totalorder %s10, 1
      %p117 = por %p115, %p116
      %p118 = scmp.ne.s32.totalorder %s110, %s113
      %p119 = scmp.eq.s32.totalorder %s10, 0
      %p120 = por %p118, %p119
      %p121 = scmp.ne.s32.totalorder %s110, %s113
      %p122 = scmp.eq.s32.totalorder %s15, 1
      %p123 = por %p121, %p122
      %p124 = scmp.ne.s32.totalorder %s113, %s114
      %p125 = scmp.eq.s32.totalorder %s15, 0
      %p126 = por %p124, %p125
      %p127 = scmp.ne.s32.totalorder %s113, %s114
      %p128 = scmp.eq.s32.totalorder %s16, 1
      %p129 = por %p127, %p128
      %p131 = scmp.ne.s32.totalorder %s114, %s130
      %p132 = scmp.eq.s32.totalorder %s16, 0
      %p133 = por %p131, %p132
      %p134 = scmp.le.s32.totalorder 1, %s10
      %p135 = scmp.lt.s32.totalorder %s10, 3
      %p136 = pnand %p134, %p135
      %p137 = pneg %p136
      // Predicated region
      $region9: #{feed_forward.1} parent=5 // pred_check
        _
      $region10: #{feed_forward.1} parent=5 // pred_check_branch
        %139 = sbr.rel (%p136) target = $region12
      $region11: #{feed_forward.1} parent=5 // pred_region
        %s140 = ssub.s32 %s10, 1
        // Predicated region
        $region13: #{feed_forward.1} parent=11 // pred_check
          %p141 = pneg %p48
        $region14: #{feed_forward.1} parent=11 // pred_check_branch
          %143 = sbr.rel (%p141) target = $region16
        $region15: #{feed_forward.1} parent=11 // pred_region
          %s144 = smul.u32 2, %s19
          %p145 = scmp.lt.s32.totalorder %s144, 1
          %s146 = scalar_select %p145, %s144, 1
          %s147 = smul.addr %s146, 8
          %s148 = scalar_lea.vmem %s0, %s147
          %s149 = smul.u32 2, %s19
        $region16: #{feed_forward.1} parent=11 // pred_fallthru
          _
      $region12: #{feed_forward.1} parent=5 // pred_fallthru
        _
      %p150 = scmp.lt.s32.totalorder %s10, 2
      // Predicated region
      $region17: #{feed_forward.1} parent=5 // pred_check
        %p151 = pneg %p150
      $region18: #{feed_forward.1} parent=5 // pred_check_branch
        %153 = sbr.rel (%p151) target = $region20
      $region19: #{feed_forward.1} parent=5 // pred_region
        // Predicated region
        $region21: #{feed_forward.1} parent=19 // pred_check
          %p154 = pneg %p68
        $region22: #{feed_forward.1} parent=19 // pred_check_branch
          %156 = sbr.rel (%p154) target = $region24
        $region23: #{feed_forward.1} parent=19 // pred_region
          %s157 = sand.u32 %s58, 1
          %s158 = sand.u32 %s58, 1
          %s159 = smul.addr %s158, 256
          %s160 = scalar_lea.vmem [#allocation3], %s159
          %s161 = smul.u32 2, %s18
          %s162 = smul.addr %s161, 8
          %s163 = scalar_lea.vmem %s1, %s162
          // Predicated region
          $region25: #{feed_forward.1} parent=23 // pred_check
            _
          $region26: #{feed_forward.1} parent=23 // pred_check_branch
            %165 = sbr.rel (0) target = $region28
          $region27: #{feed_forward.1} parent=23 // pred_region
            // Predicated region
            $region29: #{feed_forward.1} parent=27 // pred_check
              _
            $region30: #{feed_forward.1} parent=27 // pred_check_branch
              %167 = sbr.rel (0) target = $region32
            $region31: #{feed_forward.1} parent=27 // pred_region
              loop: start=0, step=1, limit=1
              $region33: #{feed_forward.1} parent=31 // loop_pre_header
                _
              $region34: #{feed_forward.1} parent=31 // loop_header
                %s169 = sphi 0, %s173
                %p170 = scmp.ge.s32.totalorder %s169, 1
                %s174 = sphi %s163, %s163
                %s175 = sphi %s160, %s160
              $region35: #{feed_forward.1} parent=31 // loop_header_branch
                %172 = sbr.rel (%p170) target = $region39
              $region36: #{feed_forward.1} parent=31 // loop_body
                %v176 = vld [vmem:[%s174] sm:$0xff]
                %177 = vst [vmem:[%s175] sm:$0xff] %v176
                %v178 = vld [vmem:[%s174 + $0x8] sm:$0xff]
                %179 = vst [vmem:[%s175 + $0x8] sm:$0xff] %v178
                %v180 = vld [vmem:[%s174 + $0x20] sm:$0xff]
                %181 = vst [vmem:[%s175 + $0x10] sm:$0xff] %v180
                %v182 = vld [vmem:[%s174 + $0x28] sm:$0xff]
                %183 = vst [vmem:[%s175 + $0x18] sm:$0xff] %v182
                %v184 = vld [vmem:[%s174 + $0x40] sm:$0xff]
                %185 = vst [vmem:[%s175 + $0x20] sm:$0xff] %v184
                %v186 = vld [vmem:[%s174 + $0x48] sm:$0xff]
                %187 = vst [vmem:[%s175 + $0x28] sm:$0xff] %v186
                %v188 = vld [vmem:[%s174 + $0x60] sm:$0xff]
                %189 = vst [vmem:[%s175 + $0x30] sm:$0xff] %v188
                %v190 = vld [vmem:[%s174 + $0x68] sm:$0xff]
                %191 = vst [vmem:[%s175 + $0x38] sm:$0xff] %v190
                %v192 = vld [vmem:[%s174 + $0x80] sm:$0xff]
                %193 = vst [vmem:[%s175 + $0x40] sm:$0xff] %v192
                %v194 = vld [vmem:[%s174 + $0x88] sm:$0xff]
                %195 = vst [vmem:[%s175 + $0x48] sm:$0xff] %v194
                %v196 = vld [vmem:[%s174 + $0xa0] sm:$0xff]
                %197 = vst [vmem:[%s175 + $0x50] sm:$0xff] %v196
                %v198 = vld [vmem:[%s174 + $0xa8] sm:$0xff]
                %199 = vst [vmem:[%s175 + $0x58] sm:$0xff] %v198
                %v200 = vld [vmem:[%s174 + $0xc0] sm:$0xff]
                %201 = vst [vmem:[%s175 + $0x60] sm:$0xff] %v200
                %v202 = vld [vmem:[%s174 + $0xc8] sm:$0xff]
                %203 = vst [vmem:[%s175 + $0x68] sm:$0xff] %v202
                %v204 = vld [vmem:[%s174 + $0xe0] sm:$0xff]
                %205 = vst [vmem:[%s175 + $0x70] sm:$0xff] %v204
                %v206 = vld [vmem:[%s174 + $0xe8] sm:$0xff]
                %207 = vst [vmem:[%s175 + $0x78] sm:$0xff] %v206
                %v208 = vld [vmem:[%s174 + $0x100] sm:$0xff]
                %209 = vst [vmem:[%s175 + $0x80] sm:$0xff] %v208
                %v210 = vld [vmem:[%s174 + $0x108] sm:$0xff]
                %211 = vst [vmem:[%s175 + $0x88] sm:$0xff] %v210
                %v212 = vld [vmem:[%s174 + $0x120] sm:$0xff]
                %213 = vst [vmem:[%s175 + $0x90] sm:$0xff] %v212
                %v214 = vld [vmem:[%s174 + $0x128] sm:$0xff]
                %215 = vst [vmem:[%s175 + $0x98] sm:$0xff] %v214
                %v216 = vld [vmem:[%s174 + $0x140] sm:$0xff]
                %217 = vst [vmem:[%s175 + $0xa0] sm:$0xff] %v216
                %v218 = vld [vmem:[%s174 + $0x148] sm:$0xff]
                %219 = vst [vmem:[%s175 + $0xa8] sm:$0xff] %v218
                %v220 = vld [vmem:[%s174 + $0x160] sm:$0xff]
                %221 = vst [vmem:[%s175 + $0xb0] sm:$0xff] %v220
                %v222 = vld [vmem:[%s174 + $0x168] sm:$0xff]
                %223 = vst [vmem:[%s175 + $0xb8] sm:$0xff] %v222
                %v224 = vld [vmem:[%s174 + $0x180] sm:$0xff]
                %225 = vst [vmem:[%s175 + $0xc0] sm:$0xff] %v224
                %v226 = vld [vmem:[%s174 + $0x188] sm:$0xff]
                %227 = vst [vmem:[%s175 + $0xc8] sm:$0xff] %v226
                %v228 = vld [vmem:[%s174 + $0x1a0] sm:$0xff]
                %229 = vst [vmem:[%s175 + $0xd0] sm:$0xff] %v228
                %v230 = vld [vmem:[%s174 + $0x1a8] sm:$0xff]
                %231 = vst [vmem:[%s175 + $0xd8] sm:$0xff] %v230
                %v232 = vld [vmem:[%s174 + $0x1c0] sm:$0xff]
                %233 = vst [vmem:[%s175 + $0xe0] sm:$0xff] %v232
                %v234 = vld [vmem:[%s174 + $0x1c8] sm:$0xff]
                %235 = vst [vmem:[%s175 + $0xe8] sm:$0xff] %v234
                %v236 = vld [vmem:[%s174 + $0x1e0] sm:$0xff]
                %237 = vst [vmem:[%s175 + $0xf0] sm:$0xff] %v236
                %v238 = vld [vmem:[%s174 + $0x1e8] sm:$0xff]
                %239 = vst [vmem:[%s175 + $0xf8] sm:$0xff] %v238
              $region37: #{feed_forward.1} parent=31 // loop_footer
                %s173 = sadd.s32 1, %s169
              $region38: #{feed_forward.1} parent=31 // loop_footer_branch
                %168 = sbr.rel target = $region34
              $region39: #{feed_forward.1} parent=31 // loop_exit
                _
            $region32: #{feed_forward.1} parent=27 // pred_fallthru
              _
            // Predicated region
            $region40: #{feed_forward.1} parent=27 // pred_check
              _
            $region41: #{feed_forward.1} parent=27 // pred_check_branch
              %241 = sbr.rel target = $region43
            $region42: #{feed_forward.1} parent=27 // pred_region
              _
            $region43: #{feed_forward.1} parent=27 // pred_fallthru
              _
          $region28: #{feed_forward.1} parent=23 // pred_fallthru
            _
          %242 = vnop
        $region24: #{feed_forward.1} parent=19 // pred_fallthru
          _
        // Predicated region
        $region44: #{feed_forward.1} parent=19 // pred_check
          %p243 = pneg %p94
        $region45: #{feed_forward.1} parent=19 // pred_check_branch
          %245 = sbr.rel (%p243) target = $region47
        $region46: #{feed_forward.1} parent=19 // pred_region
          %s246 = smul.u32 16, %s18
          %p247 = scmp.lt.s32.totalorder %s246, 31
          %s248 = scalar_select %p247, %s246, 31
          %s249 = smul.addr %s248, 8
          %s250 = scalar_lea.vmem %s2, %s249
          %s251 = smul.u32 16, %s18
        $region47: #{feed_forward.1} parent=19 // pred_fallthru
          _
      $region20: #{feed_forward.1} parent=5 // pred_fallthru
        _
      %p252 = scmp.le.s32.totalorder 1, %s10
      %p253 = scmp.lt.s32.totalorder %s10, 3
      %p254 = pnand %p252, %p253
      %p255 = pneg %p254
      // Predicated region
      $region48: #{feed_forward.1} parent=5 // pred_check
        _
      $region49: #{feed_forward.1} parent=5 // pred_check_branch
        %257 = sbr.rel (%p254) target = $region51
      $region50: #{feed_forward.1} parent=5 // pred_region
        %s258 = ssub.s32 %s10, 1
        %s259 = sand.u32 %s61, 1
        %s260 = sand.u32 %s61, 1
        %s261 = smul.addr %s260, 256
        %s262 = scalar_lea.vmem [#allocation3], %s261
        // Predicated region
        $region52: #{feed_forward.1} parent=50 // pred_check
          %p263 = pneg %p74
        $region53: #{feed_forward.1} parent=50 // pred_check_branch
          %265 = sbr.rel (%p263) target = $region55
        $region54: #{feed_forward.1} parent=50 // pred_region
          _
        $region55: #{feed_forward.1} parent=50 // pred_fallthru
          _
        %s266 = smul.u32 2, %s19
        %p267 = scmp.lt.s32.totalorder %s266, 1
        %s268 = scalar_select %p267, %s266, 1
        %s269 = smul.addr %s268, 8
        %s270 = scalar_lea.vmem %s0, %s269
        %p271 = pneg %p48
        %p272 = pneg %p45
        %s273 = sand.u32 %s61, 1
        %s274 = sand.u32 %s61, 1
        %s275 = smul.addr %s274, 256
        %s276 = scalar_lea.vmem [#allocation3], %s275
        %p277 = pneg %p74
        %p278 = pneg %p71
        %s279 = smul.u32 16, %s20
        %p280 = scmp.lt.s32.totalorder %s279, 31
        %s281 = scalar_select %p280, %s279, 31
        %s282 = smul.addr %s281, 8
        %s283 = scalar_lea.vmem %s2, %s282
        %p284 = pneg %p100
        %p285 = pneg %p97
        %p286 = pneg %p126
        %p287 = pneg %p123
        %s288 = smul.u32 2, %s19
        %p289 = scmp.lt.s32.totalorder %s288, 1
        %s290 = scalar_select %p289, %s288, 1
        %s291 = smul.addr %s290, 8
        %s292 = scalar_lea.vmem %s0, %s291
        %s293 = smul.u32 2, %s19
        %s294 = smul.u32 2, %s20
        %s295 = smul.u32 16, %s20
        %p296 = scmp.lt.s32.totalorder %s295, 31
        %s297 = scalar_select %p296, %s295, 31
        %s298 = smul.addr %s297, 8
        %s299 = scalar_lea.vmem %s2, %s298
        %s300 = smul.u32 16, %s20
        %s301 = smul.u32 2, %s19
        %p302 = scmp.eq.s32.totalorder %s20, 0
        // Predicated region
        $region56: #{feed_forward.1} parent=50 // pred_check
          %p303 = pneg %p302
        $region57: #{feed_forward.1} parent=50 // pred_check_branch
          %305 = sbr.rel (%p303) target = $region59
        $region58: #{feed_forward.1} parent=50 // pred_region
          %306 = vst [vmem:[#allocation2] sm:$0xff] 0.0
          %307 = vst [vmem:[#allocation2 + $0x8] sm:$0xff] 0.0
        $region59: #{feed_forward.1} parent=50 // pred_fallthru
          _
        %v308 = vld [vmem:[%s292] sm:$0xff]
        %v309 = vld [vmem:[%s292 + $0x8] sm:$0xff]
        %v310 = vld [vmem:[%s262] sm:$0xff]
        %v311 = vld [vmem:[%s262 + $0x8] sm:$0xff]
        %v312 = vld [vmem:[%s262 + $0x10] sm:$0xff]
        %v313 = vld [vmem:[%s262 + $0x18] sm:$0xff]
        %v314 = vld [vmem:[%s262 + $0x20] sm:$0xff]
        %v315 = vld [vmem:[%s262 + $0x28] sm:$0xff]
        %v316 = vld [vmem:[%s262 + $0x30] sm:$0xff]
        %v317 = vld [vmem:[%s262 + $0x38] sm:$0xff]
        %v318 = vld [vmem:[%s262 + $0x40] sm:$0xff]
        %v319 = vld [vmem:[%s262 + $0x48] sm:$0xff]
        %v320 = vld [vmem:[%s262 + $0x50] sm:$0xff]
        %v321 = vld [vmem:[%s262 + $0x58] sm:$0xff]
        %v322 = vld [vmem:[%s262 + $0x60] sm:$0xff]
        %v323 = vld [vmem:[%s262 + $0x68] sm:$0xff]
        %v324 = vld [vmem:[%s262 + $0x70] sm:$0xff]
        %v325 = vld [vmem:[%s262 + $0x78] sm:$0xff]
        %v326 = vld [vmem:[%s262 + $0x80] sm:$0xff]
        %v327 = vld [vmem:[%s262 + $0x88] sm:$0xff]
        %v328 = vld [vmem:[%s262 + $0x90] sm:$0xff]
        %v329 = vld [vmem:[%s262 + $0x98] sm:$0xff]
        %v330 = vld [vmem:[%s262 + $0xa0] sm:$0xff]
        %v331 = vld [vmem:[%s262 + $0xa8] sm:$0xff]
        %v332 = vld [vmem:[%s262 + $0xb0] sm:$0xff]
        %v333 = vld [vmem:[%s262 + $0xb8] sm:$0xff]
        %v334 = vld [vmem:[%s262 + $0xc0] sm:$0xff]
        %v335 = vld [vmem:[%s262 + $0xc8] sm:$0xff]
        %v336 = vld [vmem:[%s262 + $0xd0] sm:$0xff]
        %v337 = vld [vmem:[%s262 + $0xd8] sm:$0xff]
        %v338 = vld [vmem:[%s262 + $0xe0] sm:$0xff]
        %v339 = vld [vmem:[%s262 + $0xe8] sm:$0xff]
        %v340 = vld [vmem:[%s262 + $0xf0] sm:$0xff]
        %v341 = vld [vmem:[%s262 + $0xf8] sm:$0xff]
        %342 = vmatprep.subr.mxu0 %v311
        %343 = vmatpush1.msra.mxu0 %v310
        %344 = vmatprep.subr.mxu0 %v313
        %345 = vmatpush1.msra.mxu0 %v312
        %346 = vmatprep.subr.mxu0 %v315
        %347 = vmatpush1.msra.mxu0 %v314
        %348 = vmatprep.subr.mxu0 %v317
        %349 = vmatpush1.msra.mxu0 %v316
        %350 = vmatprep.subr.mxu0 %v319
        %351 = vmatpush1.msra.mxu0 %v318
        %352 = vmatprep.subr.mxu0 %v321
        %353 = vmatpush1.msra.mxu0 %v320
        %354 = vmatprep.subr.mxu0 %v323
        %355 = vmatpush1.msra.mxu0 %v322
        %356 = vmatprep.subr.mxu0 %v325
        %357 = vmatpush1.msra.mxu0 %v324
        %358 = vmatprep.subr.mxu0 %v327
        %359 = vmatpush1.msra.mxu0 %v326
        %360 = vmatprep.subr.mxu0 %v329
        %361 = vmatpush1.msra.mxu0 %v328
        %362 = vmatprep.subr.mxu0 %v331
        %363 = vmatpush1.msra.mxu0 %v330
        %364 = vmatprep.subr.mxu0 %v333
        %365 = vmatpush1.msra.mxu0 %v332
        %366 = vmatprep.subr.mxu0 %v335
        %367 = vmatpush1.msra.mxu0 %v334
        %368 = vmatprep.subr.mxu0 %v337
        %369 = vmatpush1.msra.mxu0 %v336
        %370 = vmatprep.subr.mxu0 %v339
        %371 = vmatpush1.msra.mxu0 %v338
        %372 = vmatprep.subr.mxu0 %v341
        %373 = vmatpush1.msra.mxu0 %v340
        %374 = vmatprep.subr.mxu0 0.0
        %375 = vmatpush1.msra.mxu0 0.0
        %376 = vmatprep.subr.mxu0 0.0
        %377 = vmatpush1.msra.mxu0 0.0
        %378 = vmatprep.subr.mxu0 0.0
        %379 = vmatpush1.msra.mxu0 0.0
        %380 = vmatprep.subr.mxu0 0.0
        %381 = vmatpush1.msra.mxu0 0.0
        %382 = vmatprep.subr.mxu0 0.0
        %383 = vmatpush1.msra.mxu0 0.0
        %384 = vmatprep.subr.mxu0 0.0
        %385 = vmatpush1.msra.mxu0 0.0
        %386 = vmatprep.subr.mxu0 0.0
        %387 = vmatpush1.msra.mxu0 0.0
        %388 = vmatprep.subr.mxu0 0.0
        %389 = vmatpush1.msra.mxu0 0.0
        %390 = vmatprep.subr.mxu0 0.0
        %391 = vmatpush1.msra.mxu0 0.0
        %392 = vmatprep.subr.mxu0 0.0
        %393 = vmatpush1.msra.mxu0 0.0
        %394 = vmatprep.subr.mxu0 0.0
        %395 = vmatpush1.msra.mxu0 0.0
        %396 = vmatprep.subr.mxu0 0.0
        %397 = vmatpush1.msra.mxu0 0.0
        %398 = vmatprep.subr.mxu0 0.0
        %399 = vmatpush1.msra.mxu0 0.0
        %400 = vmatprep.subr.mxu0 0.0
        %401 = vmatpush1.msra.mxu0 0.0
        %402 = vmatprep.subr.mxu0 0.0
        %403 = vmatpush1.msra.mxu0 0.0
        %404 = vmatprep.subr.mxu0 0.0
        %405 = vmatpush1.msra.mxu0 0.0
        %406 = vmatprep.mubr.f32.mxu0 0.0
        %407 = vmatmul.mubr.f32.gmra.mrb[0].mxu0 %v308
        %v408 = vpop.f32.mrb[0].mxu0
        %v409 = vadd.f32 0.0, %v408
        %v410 = vpop.f32.mrb[0].mxu0
        %v411 = vadd.f32 0.0, %v410
        %412 = vmatprep.mubr.f32.mxu0 0.0
        %413 = vmatmul.mubr.f32.gmra.mrb[0].mxu0 %v309
        %v414 = vpop.f32.mrb[0].mxu0
        %v415 = vadd.f32 0.0, %v414
        %v416 = vpop.f32.mrb[0].mxu0
        %v417 = vadd.f32 0.0, %v416
        %418 = vdwg.mxu0
        %v419 = vxor.u32 %v409, 2147483648
        %v420 = vxor.u32 %v415, 2147483648
        %v421 = vmul.f32 %v419, 1.442695
        %v422 = vpow.pop %v421
        %v423 = vmul.f32 %v420, 1.442695
        %v424 = vpow.pop %v423
        %v425 = vadd.f32 %v422, 1.0
        %v426 = vadd.f32 %v424, 1.0
        %v427 = vrcp.pop %v425
        %v428 = vmul.f32 1.0, %v427
        %v429 = vrcp.pop %v426
        %v430 = vmul.f32 1.0, %v429
        %v431 = vmul.f32 %v409, %v428
        %v432 = vmul.f32 %v415, %v430
        %v433 = vmul.f32 %v431, %v411
        %v434 = vmul.f32 %v432, %v417
        %v435 = vld [vmem:[#allocation2] sm:$0xff]
        %v436 = vld [vmem:[#allocation2 + $0x8] sm:$0xff]
        %v437 = vld [vmem:[%s299] sm:$0xff]
        %v438 = vld [vmem:[%s299 + $0x8] sm:$0xff]
        %v439 = vld [vmem:[%s299 + $0x10] sm:$0xff]
        %v440 = vld [vmem:[%s299 + $0x18] sm:$0xff]
        %v441 = vld [vmem:[%s299 + $0x20] sm:$0xff]
        %v442 = vld [vmem:[%s299 + $0x28] sm:$0xff]
        %v443 = vld [vmem:[%s299 + $0x30] sm:$0xff]
        %v444 = vld [vmem:[%s299 + $0x38] sm:$0xff]
        %v445 = vld [vmem:[%s299 + $0x40] sm:$0xff]
        %v446 = vld [vmem:[%s299 + $0x48] sm:$0xff]
        %v447 = vld [vmem:[%s299 + $0x50] sm:$0xff]
        %v448 = vld [vmem:[%s299 + $0x58] sm:$0xff]
        %v449 = vld [vmem:[%s299 + $0x60] sm:$0xff]
        %v450 = vld [vmem:[%s299 + $0x68] sm:$0xff]
        %v451 = vld [vmem:[%s299 + $0x70] sm:$0xff]
        %v452 = vld [vmem:[%s299 + $0x78] sm:$0xff]
        %453 = vmatprep.subr.mxu0 0.0
        %454 = vmatpush1.msra.mxu0 %v437
        %455 = vmatprep.subr.mxu0 0.0
        %456 = vmatpush1.msra.mxu0 %v438
        %457 = vmatprep.subr.mxu0 0.0
        %458 = vmatpush1.msra.mxu0 %v439
        %459 = vmatprep.subr.mxu0 0.0
        %460 = vmatpush1.msra.mxu0 %v440
        %461 = vmatprep.subr.mxu0 0.0
        %462 = vmatpush1.msra.mxu0 %v441
        %463 = vmatprep.subr.mxu0 0.0
        %464 = vmatpush1.msra.mxu0 %v442
        %465 = vmatprep.subr.mxu0 0.0
        %466 = vmatpush1.msra.mxu0 %v443
        %467 = vmatprep.subr.mxu0 0.0
        %468 = vmatpush1.msra.mxu0 %v444
        %469 = vmatprep.subr.mxu0 0.0
        %470 = vmatpush1.msra.mxu0 %v445
        %471 = vmatprep.subr.mxu0 0.0
        %472 = vmatpush1.msra.mxu0 %v446
        %473 = vmatprep.subr.mxu0 0.0
        %474 = vmatpush1.msra.mxu0 %v447
        %475 = vmatprep.subr.mxu0 0.0
        %476 = vmatpush1.msra.mxu0 %v448
        %477 = vmatprep.subr.mxu0 0.0
        %478 = vmatpush1.msra.mxu0 %v449
        %479 = vmatprep.subr.mxu0 0.0
        %480 = vmatpush1.msra.mxu0 %v450
        %481 = vmatprep.subr.mxu0 0.0
        %482 = vmatpush1.msra.mxu0 %v451
        %483 = vmatprep.subr.mxu0 0.0
        %484 = vmatpush1.msra.mxu0 %v452
        %485 = vmatprep.subr.mxu0 0.0
        %486 = vmatpush1.msra.mxu0 0.0
        %487 = vmatprep.subr.mxu0 0.0
        %488 = vmatpush1.msra.mxu0 0.0
        %489 = vmatprep.subr.mxu0 0.0
        %490 = vmatpush1.msra.mxu0 0.0
        %491 = vmatprep.subr.mxu0 0.0
        %492 = vmatpush1.msra.mxu0 0.0
        %493 = vmatprep.subr.mxu0 0.0
        %494 = vmatpush1.msra.mxu0 0.0
        %495 = vmatprep.subr.mxu0 0.0
        %496 = vmatpush1.msra.mxu0 0.0
        %497 = vmatprep.subr.mxu0 0.0
        %498 = vmatpush1.msra.mxu0 0.0
        %499 = vmatprep.subr.mxu0 0.0
        %500 = vmatpush1.msra.mxu0 0.0
        %501 = vmatprep.subr.mxu0 0.0
        %502 = vmatpush1.msra.mxu0 0.0
        %503 = vmatprep.subr.mxu0 0.0
        %504 = vmatpush1.msra.mxu0 0.0
        %505 = vmatprep.subr.mxu0 0.0
        %506 = vmatpush1.msra.mxu0 0.0
        %507 = vmatprep.subr.mxu0 0.0
        %508 = vmatpush1.msra.mxu0 0.0
        %509 = vmatprep.subr.mxu0 0.0
        %510 = vmatpush1.msra.mxu0 0.0
        %511 = vmatprep.subr.mxu0 0.0
        %512 = vmatpush1.msra.mxu0 0.0
        %513 = vmatprep.subr.mxu0 0.0
        %514 = vmatpush1.msra.mxu0 0.0
        %515 = vmatprep.subr.mxu0 0.0
        %516 = vmatpush1.msra.mxu0 0.0
        %517 = vmatprep.mubr.f32.mxu0 0.0
        %518 = vmatmul.mubr.f32.gmra.mrb[0].mxu0 %v433
        %v519 = vpop.f32.mrb[0].mxu0
        %v520 = vadd.f32 0.0, %v519
        %v521 = vpop.f32.mrb[0].mxu0
        %522 = vmatprep.mubr.f32.mxu0 0.0
        %523 = vmatmul.mubr.f32.gmra.mrb[0].mxu0 %v434
        %v524 = vpop.f32.mrb[0].mxu0
        %v525 = vadd.f32 0.0, %v524
        %v526 = vpop.f32.mrb[0].mxu0
        %527 = vdwg.mxu0
        %v528 = vadd.f32 %v435, %v520
        %v529 = vadd.f32 %v436, %v525
        %530 = vst [vmem:[#allocation2] sm:$0xff] %v528
        %531 = vst [vmem:[#allocation2 + $0x8] sm:$0xff] %v529
        %p532 = scmp.eq.s32.totalorder %s20, 1
        // Predicated region
        $region60: #{feed_forward.1} parent=50 // pred_check
          %p533 = pneg %p532
        $region61: #{feed_forward.1} parent=50 // pred_check_branch
          %535 = sbr.rel (%p533) target = $region63
        $region62: #{feed_forward.1} parent=50 // pred_region
          %v536 = vld [vmem:[#allocation2] sm:$0xff]
          %v537 = vld [vmem:[#allocation2 + $0x8] sm:$0xff]
          %538 = vst [vmem:[#allocation4] sm:$0xff] %v536
          %539 = vst [vmem:[#allocation4 + $0x8] sm:$0xff] %v537
        $region63: #{feed_forward.1} parent=50 // pred_fallthru
          _
        // Predicated region
        $region64: #{feed_forward.1} parent=50 // pred_check
          %p540 = pneg %p123
        $region65: #{feed_forward.1} parent=50 // pred_check_branch
          %542 = sbr.rel (%p540) target = $region67
        $region66: #{feed_forward.1} parent=50 // pred_region
          %s543 = smul.u32 2, %s19
          %s545 = ssub.s32 256, 256
          %546 = vsyncadd [#allocation5], %s545
          %s547 = smul.addr %s543, 128
          %s548 = scalar_lea.hbm %s3, %s547
          %s549 = sshll.u32 [#allocation4], 4
          %s550 = int_to_ptr.vmem [resolvable:$true] %s549
          %555 = dma.vmem_to_hbm [thread:$0]  %s550, 256, %s548, [#allocation5], 128, 128, 8
        $region67: #{feed_forward.1} parent=50 // pred_fallthru
          _
        // Predicated region
        $region68: #{feed_forward.1} parent=50 // pred_check
          %p556 = pneg %p123
        $region69: #{feed_forward.1} parent=50 // pred_check_branch
          %558 = sbr.rel (%p556) target = $region71
        $region70: #{feed_forward.1} parent=50 // pred_region
          %559 = dma.done [#allocation5], 256
        $region71: #{feed_forward.1} parent=50 // pred_fallthru
          _
      $region51: #{feed_forward.1} parent=5 // pred_fallthru
        _
      %p560 = scmp.le.s32.totalorder 2, %s10
      // Predicated region
      $region72: #{feed_forward.1} parent=5 // pred_check
        %p561 = pneg %p560
      $region73: #{feed_forward.1} parent=5 // pred_check_branch
        %563 = sbr.rel (%p561) target = $region75
      $region74: #{feed_forward.1} parent=5 // pred_region
        %s564 = ssub.s32 %s10, 2
      $region75: #{feed_forward.1} parent=5 // pred_fallthru
        _
    $region6: #{feed_forward.1} parent=1 // loop_footer
      %s14 = sadd.s32 1, %s10
    $region7: #{feed_forward.1} parent=1 // loop_footer_branch
      %9 = sbr.rel target = $region3
    $region8: #{feed_forward.1} parent=1 // loop_exit
      _
    %565 = vsyncpa [#allocation5], 1
    %s566 = scalar_lea.sflag [#allocation5], 1
    %567 = vsyncpa %s566, 1

</llo_original>
